<compile_context>
chip_gen: v7x
topology: tpu7x:2x2x1
jax: 0.10.0
libtpu: 0.0.40
codegen_flags: <defaults>
</compile_context>

<pallas_src>
import numpy as np
import jax
import jax.numpy as jnp
from jax.experimental import pallas as pl
from jax.experimental.pallas import tpu as pltpu

# ---------------- model dims (synthetic, small) ----------------
B, C_IN, H, W = 2, 4, 16, 16            # input image
NUM_FTRS = 32                            # backbone output channels ("num_ftrs")
FEATURE_DIM = 64                         # feature_dim
BN_EPS = 1e-5
LANES = 128                              # lane-dense output width (>= FEATURE_DIM)
SUBLANES = 8                             # f32 sublanes per vreg


def make_head_kernel(batch, c_in, out_rows, lanes):
    """Builds the fused-head kernel for a given (static) batch / channel tile.

    x_ref : [batch*c_in, H*W] f32   (full f32 sublane packing)
    w_ref : [c_in, lanes]     f32   (conv @ fc, BN+bias+1/HW folded, lane-padded)
    b_ref : [1, lanes]        f32
    out   : [out_rows, lanes] f32   (out_rows = batch rounded up to 8 -> unmasked vst)
    """

    def kernel(x_ref, w_ref, b_ref, out_ref):
        # Spatial SUM (1/HW already folded into w): one XLU lane reduce over
        # two full vregs -> [batch*c_in, 1].
        x_sum = jnp.sum(x_ref[...], axis=-1, keepdims=True)
        bias = b_ref[...]                                   # [1, lanes]

        if batch <= 8:
            # VPU path: M=batch, K=c_in is far too small for the MXU
            # (vmatmul push + result-FIFO pop round-trip); unrolled broadcast
            # multiply-adds keep everything on the VALU slots.
            rows = []
            for bb in range(batch):
                acc = bias
                for cc in range(c_in):
                    r = bb * c_in + cc
                    # [1,1] lane-broadcast * [1,lanes] -> [1,lanes]
                    acc = acc + x_sum[r:r + 1, :] * w_ref[cc:cc + 1, :]
                rows.append(acc)
            if out_rows > batch:
                # Zero-pad batch rows so the single store is a full (8,128)
                # unmasked vst.
                rows.append(jnp.zeros((out_rows - batch, lanes), jnp.float32))
            out_ref[...] = jnp.concatenate(rows, axis=0)
        else:
            # MXU path for real batch tiles (M >= 8, ideally >= 128).
            xm = x_sum.reshape(batch, c_in)
            out = jnp.dot(xm, w_ref[...], preferred_element_type=jnp.float32) + bias
            if out_rows > batch:
                out = jnp.concatenate(
                    [out, jnp.zeros((out_rows - batch, lanes), jnp.float32)], axis=0)
            out_ref[...] = out

    return kernel


def fuse_head_params(params):
    """Host-side fold of BN(eval) + fc bias into the fc weight, composition of
    the 1x1-conv backbone stub with the fc Linear, and the 1/(H*W) pooling
    scale. Pads to 128 lanes so the kernel's output store is lane-dense."""
    scale = params["bn_gamma"] * jax.lax.rsqrt(params["bn_var"] + BN_EPS)    # [1, F]
    w_fc = params["fc_w"] * scale                                            # [NUM_FTRS, F]
    b_fc = (params["fc_b"] - params["bn_mean"]) * scale + params["bn_beta"]  # [1, F]
    w_fused = (params["w_conv"] @ w_fc) * (1.0 / (H * W))                    # [C_IN, F]
    pad = LANES - FEATURE_DIM
    w_fused = jnp.pad(w_fused, ((0, 0), (0, pad)))                           # [C_IN, 128]
    b_fused = jnp.pad(b_fc, ((0, 0), (0, pad)))                              # [1, 128]
    return w_fused.astype(jnp.float32), b_fused.astype(jnp.float32)


def ft_net_forward(x_nchw, w_fused, b_fused):
    b, cin, h, w = x_nchw.shape
    # [B*C_IN, H*W]: contiguous NCHW reshape (no transpose). 8 rows x 256
    # lanes packs exactly two full f32 vregs.
    x2 = x_nchw.reshape(b * cin, h * w)
    out_rows = ((b + SUBLANES - 1) // SUBLANES) * SUBLANES   # full-sublane output tile

    vmem = pl.BlockSpec(memory_space=pltpu.MemorySpace.VMEM)
    out_pad = pl.pallas_call(
        make_head_kernel(b, cin, out_rows, LANES),
        out_shape=jax.ShapeDtypeStruct((out_rows, LANES), jnp.float32),
        in_specs=[vmem, vmem, vmem],
        out_specs=vmem,
    )(x2, w_fused, b_fused)

    # TODO(synk): at real batch sizes replace the gridless call with a
    # batch-parallel grid + per-array BlockSpecs (see header notes).
    return out_pad[:b, :FEATURE_DIM]


def init_params(key):
    """Synthetic params (shapes follow ft_net.__init__ for the surviving path).
    BN running stats are non-trivial so the host-side BN fold is exercised.
    The fc_g / max-pool branch is dead in eval / pcb_n_parts==0 and omitted."""
    ks = jax.random.split(key, 5)
    p = {}
    # backbone stub: 1x1 conv producing NUM_FTRS channels (kaiming fan_in).
    # TODO(synk): real backbone comes from nets_factory.network_fn[model_name].
    p["w_conv"] = jax.random.normal(ks[0], (C_IN, NUM_FTRS), jnp.float32) * np.sqrt(2.0 / C_IN)
    # fc = Linear(num_ftrs, feature_dim) + BatchNorm1d, weights_init_kaiming:
    #   Linear kaiming fan_out, bias 0; BN gamma ~ N(1, 0.02), beta 0.
    p["fc_w"] = jax.random.normal(ks[1], (NUM_FTRS, FEATURE_DIM), jnp.float32) * np.sqrt(2.0 / FEATURE_DIM)
    p["fc_b"] = jnp.zeros((1, FEATURE_DIM), jnp.float32)
    p["bn_gamma"] = 1.0 + 0.02 * jax.random.normal(ks[2], (1, FEATURE_DIM), jnp.float32)
    p["bn_beta"] = jnp.zeros((1, FEATURE_DIM), jnp.float32)
    p["bn_mean"] = 0.1 * jax.random.normal(ks[3], (1, FEATURE_DIM), jnp.float32)
    p["bn_var"] = 1.0 + 0.5 * jax.nn.softplus(jax.random.normal(ks[4], (1, FEATURE_DIM), jnp.float32))
    return p


def ft_net_reference(x_nchw, params):
    """Unfused pure-JAX reference of the eval forward path (correctness check
    for both the kernel and the host-side fusion)."""
    b, cin, h, w = x_nchw.shape
    x_flat = jnp.transpose(x_nchw, (0, 2, 3, 1)).reshape(b * h * w, cin)
    feat = x_flat @ params["w_conv"]                       # backbone stub (1x1 conv)
    feat3 = feat.reshape(b, h * w, NUM_FTRS)
    avg = feat3.mean(axis=1)                               # F.avg_pool2d + view
    e = avg @ params["fc_w"] + params["fc_b"]              # fc Linear
    e = (e - params["bn_mean"]) / jnp.sqrt(params["bn_var"] + BN_EPS)
    e = e * params["bn_gamma"] + params["bn_beta"]         # BatchNorm1d (eval)
    return e                                               # Dropout(eval) = identity


if __name__ == "__main__":
    key = jax.random.PRNGKey(0)
    k_x, k_p = jax.random.split(key)
    x = jax.random.normal(k_x, (B, C_IN, H, W), jnp.float32)
    params = init_params(k_p)

    w_fused, b_fused = fuse_head_params(params)     # host-side fold (plain JAX)

    emb = ft_net_forward(x, w_fused, b_fused)
    emb = jax.block_until_ready(emb)

    ref = ft_net_reference(x, params)
    np.testing.assert_allclose(np.asarray(emb), np.asarray(ref), rtol=1e-3, atol=1e-3)

    print("KERNEL_OK")
</pallas_src>

<mosaic_0001>
module attributes {stable_mosaic.version = 11 : i64} {
  func.func @kernel(%arg0: memref<8x256xf32, #tpu.memory_space<vmem>>, %arg1: memref<4x128xf32, #tpu.memory_space<vmem>>, %arg2: memref<1x128xf32, #tpu.memory_space<vmem>>, %arg3: memref<8x128xf32, #tpu.memory_space<vmem>>) attributes {dimension_semantics = [], scalar_prefetch = 0 : i64, scratch_operands = 0 : i64, tpu.core_type = #tpu.core_type<tc>} {
    %c0 = arith.constant 0 : index
    %c0_0 = arith.constant 0 : index
    %0 = vector.load %arg0[%c0, %c0_0] : memref<8x256xf32, #tpu.memory_space<vmem>>, vector<8x256xf32>
    %cst = arith.constant dense<0.000000e+00> : vector<8xf32>
    %1 = vector.multi_reduction <add>, %0, %cst [1] : vector<8x256xf32> to vector<8xf32>
    %2 = vector.shape_cast %1 : vector<8xf32> to vector<8x1xf32>
    %c0_1 = arith.constant 0 : index
    %c0_2 = arith.constant 0 : index
    %3 = vector.load %arg2[%c0_1, %c0_2] : memref<1x128xf32, #tpu.memory_space<vmem>>, vector<1x128xf32>
    %4 = vector.extract_strided_slice %2 {offsets = [0, 0], sizes = [1, 1], strides = [1, 1]} : vector<8x1xf32> to vector<1x1xf32>
    %c0_3 = arith.constant 0 : index
    %c0_4 = arith.constant 0 : index
    %5 = vector.load %arg1[%c0_3, %c0_4] : memref<4x128xf32, #tpu.memory_space<vmem>>, vector<1x128xf32>
    %6 = vector.broadcast %4 : vector<1x1xf32> to vector<1x128xf32>
    %7 = arith.mulf %6, %5 : vector<1x128xf32>
    %8 = arith.addf %3, %7 : vector<1x128xf32>
    %9 = vector.extract_strided_slice %2 {offsets = [1, 0], sizes = [1, 1], strides = [1, 1]} : vector<8x1xf32> to vector<1x1xf32>
    %c1 = arith.constant 1 : index
    %c0_5 = arith.constant 0 : index
    %10 = vector.load %arg1[%c1, %c0_5] : memref<4x128xf32, #tpu.memory_space<vmem>>, vector<1x128xf32>
    %11 = vector.broadcast %9 : vector<1x1xf32> to vector<1x128xf32>
    %12 = arith.mulf %11, %10 : vector<1x128xf32>
    %13 = arith.addf %8, %12 : vector<1x128xf32>
    %14 = vector.extract_strided_slice %2 {offsets = [2, 0], sizes = [1, 1], strides = [1, 1]} : vector<8x1xf32> to vector<1x1xf32>
    %c2 = arith.constant 2 : index
    %c0_6 = arith.constant 0 : index
    %15 = vector.load %arg1[%c2, %c0_6] : memref<4x128xf32, #tpu.memory_space<vmem>>, vector<1x128xf32>
    %16 = vector.broadcast %14 : vector<1x1xf32> to vector<1x128xf32>
    %17 = arith.mulf %16, %15 : vector<1x128xf32>
    %18 = arith.addf %13, %17 : vector<1x128xf32>
    %19 = vector.extract_strided_slice %2 {offsets = [3, 0], sizes = [1, 1], strides = [1, 1]} : vector<8x1xf32> to vector<1x1xf32>
    %c3 = arith.constant 3 : index
    %c0_7 = arith.constant 0 : index
    %20 = vector.load %arg1[%c3, %c0_7] : memref<4x128xf32, #tpu.memory_space<vmem>>, vector<1x128xf32>
    %21 = vector.broadcast %19 : vector<1x1xf32> to vector<1x128xf32>
    %22 = arith.mulf %21, %20 : vector<1x128xf32>
    %23 = arith.addf %18, %22 : vector<1x128xf32>
    %24 = vector.extract_strided_slice %2 {offsets = [4, 0], sizes = [1, 1], strides = [1, 1]} : vector<8x1xf32> to vector<1x1xf32>
    %c0_8 = arith.constant 0 : index
    %c0_9 = arith.constant 0 : index
    %25 = vector.load %arg1[%c0_8, %c0_9] : memref<4x128xf32, #tpu.memory_space<vmem>>, vector<1x128xf32>
    %26 = vector.broadcast %24 : vector<1x1xf32> to vector<1x128xf32>
    %27 = arith.mulf %26, %25 : vector<1x128xf32>
    %28 = arith.addf %3, %27 : vector<1x128xf32>
    %29 = vector.extract_strided_slice %2 {offsets = [5, 0], sizes = [1, 1], strides = [1, 1]} : vector<8x1xf32> to vector<1x1xf32>
    %c1_10 = arith.constant 1 : index
    %c0_11 = arith.constant 0 : index
    %30 = vector.load %arg1[%c1_10, %c0_11] : memref<4x128xf32, #tpu.memory_space<vmem>>, vector<1x128xf32>
    %31 = vector.broadcast %29 : vector<1x1xf32> to vector<1x128xf32>
    %32 = arith.mulf %31, %30 : vector<1x128xf32>
    %33 = arith.addf %28, %32 : vector<1x128xf32>
    %34 = vector.extract_strided_slice %2 {offsets = [6, 0], sizes = [1, 1], strides = [1, 1]} : vector<8x1xf32> to vector<1x1xf32>
    %c2_12 = arith.constant 2 : index
    %c0_13 = arith.constant 0 : index
    %35 = vector.load %arg1[%c2_12, %c0_13] : memref<4x128xf32, #tpu.memory_space<vmem>>, vector<1x128xf32>
    %36 = vector.broadcast %34 : vector<1x1xf32> to vector<1x128xf32>
    %37 = arith.mulf %36, %35 : vector<1x128xf32>
    %38 = arith.addf %33, %37 : vector<1x128xf32>
    %39 = vector.extract_strided_slice %2 {offsets = [7, 0], sizes = [1, 1], strides = [1, 1]} : vector<8x1xf32> to vector<1x1xf32>
    %c3_14 = arith.constant 3 : index
    %c0_15 = arith.constant 0 : index
    %40 = vector.load %arg1[%c3_14, %c0_15] : memref<4x128xf32, #tpu.memory_space<vmem>>, vector<1x128xf32>
    %41 = vector.broadcast %39 : vector<1x1xf32> to vector<1x128xf32>
    %42 = arith.mulf %41, %40 : vector<1x128xf32>
    %43 = arith.addf %38, %42 : vector<1x128xf32>
    %cst_16 = arith.constant 0.000000e+00 : f32
    %44 = vector.broadcast %cst_16 : f32 to vector<6x128xf32>
    %45 = tpu.concatenate %23, %43, %44 in 0 : vector<1x128xf32>, vector<1x128xf32>, vector<6x128xf32> -> vector<8x128xf32>
    %c0_17 = arith.constant 0 : index
    %c0_18 = arith.constant 0 : index
    %46 = vector.load %arg3[%c0_17, %c0_18] : memref<8x128xf32, #tpu.memory_space<vmem>>, vector<8x128xf32>
    tpu.vector_store %arg3[%c0_17, %c0_18], %45 {strides = array<i32>} : memref<8x128xf32, #tpu.memory_space<vmem>>, vector<8x128xf32>,
    return
  }
}

</mosaic_0001>

<llo_original>
// kernel: tpu_custom_call.1
$region0: #{tpu_custom_call.1}
  #allocation0 [shape = 'u32[]', space=smem, size = 0x4, offset = 0x4, fixed_abs, tag = 'smem constant byte address 0x4 - core index']
  #allocation1 [shape = 'u32[144,128]{1,0:T(1,128)}', space=vmem, size = 0x12000, scoped, tag = 'internal scratch']
  %s0 = inlined_call_operand.hbm [shape: f32[8,256], index: 0, kind: input, shape index: {}]
  %s1 = inlined_call_operand.hbm [shape: f32[4,128], index: 1, kind: input, shape index: {}]
  %s2 = inlined_call_operand.vmem [shape: f32[1,128], index: 2, kind: input, shape index: {}]
  %s3 = inlined_call_operand.hbm [shape: f32[8,128], index: 3, kind: output, shape index: {}]
  %s4 = sld [smem:[#allocation0]]
  $region30: #{tpu_custom_call.1} parent=0
    _
  %s6 = ssub.s32 1, %s4
  %s7 = scalar_select 0, %s6, %s4
  $region1: #{tpu_custom_call.1} parent=0
    #allocation2 [shape = 'u8[8192]{0}', space=vmem, size = 0x2000, scoped, tag = 'input window, operand 0, single buffered']
    #allocation3 [shape = 's32[1]{0}', space=sflag, size = 0x4, scoped, tag = 'scoped memory for tpu_custom_call.1']
    #allocation4 [shape = 's32[1]{0}', space=sflag, size = 0x4, scoped, tag = 'scoped memory for tpu_custom_call.1']
    #allocation5 [shape = 'u8[2048]{0}', space=vmem, size = 0x800, scoped, tag = 'input window, operand 1, single buffered']
    #allocation6 [shape = 's32[1]{0}', space=sflag, size = 0x4, scoped, tag = 'scoped memory for tpu_custom_call.1']
    #allocation7 [shape = 'u8[4096]{0}', space=vmem, size = 0x1000, scoped, tag = 'output window, operand 0, single buffered']
    %8 = vsyncpa [#allocation3], 0
    %9 = vsyncpa [#allocation6], 0
    %10 = vsyncpa [#allocation4], 0
    // Predicated region
    $region2: #{tpu_custom_call.1} parent=1 // pred_check
      _
    $region3: #{tpu_custom_call.1} parent=1 // pred_check_branch
      %12 = sbr.rel (0) target = $region5
    $region4: #{tpu_custom_call.1} parent=1 // pred_region
      %s14 = ssub.s32 256, 256
      %15 = vsyncadd [#allocation3], %s14
      %s17 = sshll.u32 [#allocation2], 4
      %s18 = int_to_ptr.vmem [resolvable:$true] %s17
      %20 = dma.hbm_to_vmem [thread:$0]  %s0, 256, %s18, [#allocation3]
    $region5: #{tpu_custom_call.1} parent=1 // pred_fallthru
      _
    // Predicated region
    $region6: #{tpu_custom_call.1} parent=1 // pred_check
      _
    $region7: #{tpu_custom_call.1} parent=1 // pred_check_branch
      %22 = sbr.rel (0) target = $region9
    $region8: #{tpu_custom_call.1} parent=1 // pred_region
      %s24 = ssub.s32 64, 64
      %25 = vsyncadd [#allocation6], %s24
      %s27 = sshll.u32 [#allocation5], 4
      %s28 = int_to_ptr.vmem [resolvable:$true] %s27
      %30 = dma.hbm_to_vmem [thread:$0]  %s1, 64, %s28, [#allocation6]
    $region9: #{tpu_custom_call.1} parent=1 // pred_fallthru
      _
    // Predicated region
    $region10: #{tpu_custom_call.1} parent=1 // pred_check
      _
    $region11: #{tpu_custom_call.1} parent=1 // pred_check_branch
      %32 = sbr.rel (0) target = $region13
    $region12: #{tpu_custom_call.1} parent=1 // pred_region
      _
    $region13: #{tpu_custom_call.1} parent=1 // pred_fallthru
      _
    // Predicated region
    $region14: #{tpu_custom_call.1} parent=1 // pred_check
      _
    $region15: #{tpu_custom_call.1} parent=1 // pred_check_branch
      %34 = sbr.rel (0) target = $region17
    $region16: #{tpu_custom_call.1} parent=1 // pred_region
      %35 = dma.done [#allocation3], 256
    $region17: #{tpu_custom_call.1} parent=1 // pred_fallthru
      _
    // Predicated region
    $region18: #{tpu_custom_call.1} parent=1 // pred_check
      _
    $region19: #{tpu_custom_call.1} parent=1 // pred_check_branch
      %37 = sbr.rel (0) target = $region21
    $region20: #{tpu_custom_call.1} parent=1 // pred_region
      %38 = dma.done [#allocation6], 64
    $region21: #{tpu_custom_call.1} parent=1 // pred_fallthru
      _
    %v39 = vld [vmem:[#allocation2] sm:$0xff]
    %v40 = vld [vmem:[#allocation2 + $0x8] sm:$0xff]
    %v41 = vadd.f32 %v39, %v40
    %42 = vadd.xlane.f32.xlu0 %v41
    %v43 = vpop.xlane.xlu0 %42
    %v44 = vld [vmem:[%s2] sm:$0x1]
    %v45 = vld [vmem:[#allocation5] sm:$0x1]
    %v46 = vmul.f32 %v43, %v45
    %v47 = vadd.f32 %v44, %v46
    %v48 = vld [vmem:[#allocation5 + $0x1] sm:$0x1]
    %v50 = vrot.slane %v48, 7
    %v52 = vmul.f32 %v43, %v50
    %v55 = vunpack.c.l.s4 1966171168
    %v56 = vunpack.c.0.s8 %v55
    %v57 = vlaneseq
    %v58 = vshrl.u32 %v57, 7
    %v59 = vsub.s32 %v56, %v58
    %v60 = vrot.slane %v52, %v59
    %v61 = vcombine.high %v60, %v60
    %v63 = vunpack.c.l.s4 1966171168
    %v64 = vunpack.c.0.s8 %v63
    %v65 = vlaneseq
    %v66 = vshrl.u32 %v65, 7
    %v67 = vsub.s32 %v64, %v66
    %v68 = vrot.slane %v61, %v67
    %v70 = vadd.f32 %v47, %v68
    %v71 = vld [vmem:[#allocation5 + $0x2] sm:$0x1]
    %v73 = vrot.slane %v71, 6
    %v75 = vmul.f32 %v43, %v73
    %v78 = vunpack.c.l.s4 1966171168
    %v79 = vunpack.c.0.s8 %v78
    %v80 = vlaneseq
    %v81 = vshrl.u32 %v80, 7
    %v82 = vsub.s32 %v79, %v81
    %v83 = vrot.slane %v75, %v82
    %v85 = vunpack.c.l.s4 1966171168
    %v86 = vunpack.c.0.s8 %v85
    %v87 = vlaneseq
    %v88 = vshrl.u32 %v87, 7
    %v89 = vsub.s32 %v86, %v88
    %v90 = vrot.slane %v83, %v89
    %v91 = vcombine.high %v90, %v90
    %v93 = vadd.f32 %v70, %v91
    %v94 = vld [vmem:[#allocation5 + $0x3] sm:$0x1]
    %v96 = vrot.slane %v94, 5
    %v98 = vmul.f32 %v43, %v96
    %v101 = vunpack.c.l.s4 1966171168
    %v102 = vunpack.c.0.s8 %v101
    %v103 = vlaneseq
    %v104 = vshrl.u32 %v103, 7
    %v105 = vsub.s32 %v102, %v104
    %v106 = vrot.slane %v98, %v105
    %v107 = vcombine.high %v106, %v106
    %v109 = vunpack.c.l.s4 1966171168
    %v110 = vunpack.c.0.s8 %v109
    %v111 = vlaneseq
    %v112 = vshrl.u32 %v111, 7
    %v113 = vsub.s32 %v110, %v112
    %v114 = vrot.slane %v107, %v113
    %v115 = vcombine.high %v114, %v114
    %v117 = vadd.f32 %v93, %v115
    %v119 = vrot.slane %v45, 4
    %v121 = vmul.f32 %v43, %v119
    %v123 = vcombine.high %v121, %v121
    %v125 = vunpack.c.l.s4 1966171168
    %v126 = vunpack.c.0.s8 %v125
    %v127 = vlaneseq
    %v128 = vshrl.u32 %v127, 7
    %v129 = vsub.s32 %v126, %v128
    %v130 = vrot.slane %v123, %v129
    %v132 = vunpack.c.l.s4 1966171168
    %v133 = vunpack.c.0.s8 %v132
    %v134 = vlaneseq
    %v135 = vshrl.u32 %v134, 7
    %v136 = vsub.s32 %v133, %v135
    %v137 = vrot.slane %v130, %v136
    %v139 = vadd.f32 %v44, %v137
    %v140 = vrot.slane %v48, 3
    %v142 = vmul.f32 %v43, %v140
    %v144 = vcombine.high %v142, %v142
    %v146 = vunpack.c.l.s4 1966171168
    %v147 = vunpack.c.0.s8 %v146
    %v148 = vlaneseq
    %v149 = vshrl.u32 %v148, 7
    %v150 = vsub.s32 %v147, %v149
    %v151 = vrot.slane %v144, %v150
    %v152 = vcombine.high %v151, %v151
    %v154 = vunpack.c.l.s4 1966171168
    %v155 = vunpack.c.0.s8 %v154
    %v156 = vlaneseq
    %v157 = vshrl.u32 %v156, 7
    %v158 = vsub.s32 %v155, %v157
    %v159 = vrot.slane %v152, %v158
    %v161 = vadd.f32 %v139, %v159
    %v162 = vrot.slane %v71, 2
    %v164 = vmul.f32 %v43, %v162
    %v166 = vcombine.high %v164, %v164
    %v168 = vunpack.c.l.s4 1966171168
    %v169 = vunpack.c.0.s8 %v168
    %v170 = vlaneseq
    %v171 = vshrl.u32 %v170, 7
    %v172 = vsub.s32 %v169, %v171
    %v173 = vrot.slane %v166, %v172
    %v175 = vunpack.c.l.s4 1966171168
    %v176 = vunpack.c.0.s8 %v175
    %v177 = vlaneseq
    %v178 = vshrl.u32 %v177, 7
    %v179 = vsub.s32 %v176, %v178
    %v180 = vrot.slane %v173, %v179
    %v181 = vcombine.high %v180, %v180
    %v183 = vadd.f32 %v161, %v181
    %v184 = vrot.slane %v94, 1
    %v186 = vmul.f32 %v43, %v184
    %v188 = vcombine.high %v186, %v186
    %v190 = vunpack.c.l.s4 1966171168
    %v191 = vunpack.c.0.s8 %v190
    %v192 = vlaneseq
    %v193 = vshrl.u32 %v192, 7
    %v194 = vsub.s32 %v191, %v193
    %v195 = vrot.slane %v188, %v194
    %v196 = vcombine.high %v195, %v195
    %v198 = vunpack.c.l.s4 1966171168
    %v199 = vunpack.c.0.s8 %v198
    %v200 = vlaneseq
    %v201 = vshrl.u32 %v200, 7
    %v202 = vsub.s32 %v199, %v201
    %v203 = vrot.slane %v196, %v202
    %v204 = vcombine.high %v203, %v203
    %v206 = vadd.f32 %v183, %v204
    %v208 = vlaneseq
    %v209 = vshrl.u32 %v208, 7
    %v210 = vsub.s32 0, %v209
    %v211 = vrot.slane %v206, %v210
    %vm213 = vcmask 1040384
    %v214 = vsel %vm213, %v117, %v211
    %vm215 = vcmask 1041408
    %v216 = vsel %vm215, %v214, 0.0
    %217 = vst [vmem:[#allocation7] sm:$0xff] %v216
    // Predicated region
    $region22: #{tpu_custom_call.1} parent=1 // pred_check
      _
    $region23: #{tpu_custom_call.1} parent=1 // pred_check_branch
      %219 = sbr.rel (0) target = $region25
    $region24: #{tpu_custom_call.1} parent=1 // pred_region
      %s221 = ssub.s32 128, 128
      %222 = vsyncadd [#allocation4], %s221
      %s224 = sshll.u32 [#allocation7], 4
      %s225 = int_to_ptr.vmem [resolvable:$true] %s224
      %227 = dma.vmem_to_hbm [thread:$0]  %s225, 128, %s3, [#allocation4]
    $region25: #{tpu_custom_call.1} parent=1 // pred_fallthru
      _
    // Predicated region
    $region26: #{tpu_custom_call.1} parent=1 // pred_check
      _
    $region27: #{tpu_custom_call.1} parent=1 // pred_check_branch
      %229 = sbr.rel (0) target = $region29
    $region28: #{tpu_custom_call.1} parent=1 // pred_region
      %230 = dma.done [#allocation4], 128
    $region29: #{tpu_custom_call.1} parent=1 // pred_fallthru
      _
    %231 = vsyncpa [#allocation3], 1
    %232 = vsyncpa [#allocation6], 1
    %233 = vsyncpa [#allocation4], 1

</llo_original>
